<compile_context>
chip_gen: v6e
topology: v6e:2x2x1
jax: 0.10.0
libtpu: 0.0.40
codegen_flags: <defaults>
</compile_context>

<pallas_src>
import functools

import jax
import jax.numpy as jnp
import numpy as np
from jax.experimental import pallas as pl
from jax.experimental.pallas import tpu as pltpu

_BN_EPS = 1e-5
_LANE = 128                      # lane width: Cout / K padded to multiples of this
_TM = 256                        # im2col rows per tile
_TK = 512                        # max reduction-tile width (multiple of 128)
_VMEM_LIMIT = 32 * 1024 * 1024   # conservative: fits v5e/v6e/v7x scoped VMEM


# ------------------------------- helpers ----------------------------------- #

def _round_up(x, m):
    return ((x + m - 1) // m) * m


def _m_pad_and_tile(m):
    """Pad the row count and pick the row-tile size (tm divides m_pad, tm % 8 == 0)."""
    if m <= _TM:
        mp = _round_up(m, 8)
        return mp, mp
    mp = _round_up(m, _TM)
    return mp, _TM


def _k_pad_and_tile(k):
    """Pad the reduction length and pick the K-tile size (tk divides k_pad, tk % 128 == 0)."""
    if k <= _TK:
        kp = _round_up(k, _LANE)
        return kp, kp
    kp = _round_up(k, _TK)
    return kp, _TK


def _pad2d(a, rows, cols):
    return jnp.pad(a, ((0, rows - a.shape[0]), (0, cols - a.shape[1])))


def _im2col(x_nhwc, ksize, stride, padding):
    """(N,H,W,C) -> (N*Ho*Wo, ksize*ksize*C) patches; rows row-major in (n,ho,wo)."""
    n, h, w, c = x_nhwc.shape
    xp = jnp.pad(x_nhwc, ((0, 0), (padding, padding), (padding, padding), (0, 0)))
    ho = (h + 2 * padding - ksize) // stride + 1
    wo = (w + 2 * padding - ksize) // stride + 1
    cols = []
    for kh in range(ksize):
        for kw in range(ksize):
            cols.append(xp[:, kh:kh + (ho - 1) * stride + 1:stride,
                           kw:kw + (wo - 1) * stride + 1:stride, :])
    patches = jnp.concatenate(cols, axis=-1)          # (N, Ho, Wo, k*k*C)
    return patches.reshape(n * ho * wo, ksize * ksize * c), ho, wo


def _w_to_padded_matrix(w_oihw, c_pad):
    """Torch conv weight (Cout,Cin,kh,kw) -> bf16 (K_pad, Cout_pad) matching im2col tap order."""
    cout, cin, kh, kw = w_oihw.shape
    k = kh * kw * cin
    k_pad, _ = _k_pad_and_tile(k)
    wm = jnp.transpose(w_oihw, (2, 3, 1, 0)).reshape(k, cout)
    wm = jnp.pad(wm, ((0, k_pad - k), (0, c_pad - cout)))
    return wm.astype(jnp.bfloat16)


# ----------------------------- Pallas kernels ------------------------------ #

def _matmul_stats_kernel(p_ref, w_ref, y_ref, stats_ref, acc_ref):
    """y = patches @ w (bf16 in, f32 accum); also emit per-M-tile channel sum/sumsq."""
    k = pl.program_id(1)

    @pl.when(k == 0)
    def _init():
        acc_ref[...] = jnp.zeros_like(acc_ref)

    acc_ref[...] += jnp.dot(p_ref[...], w_ref[...],
                            preferred_element_type=jnp.float32)

    @pl.when(k == pl.num_programs(1) - 1)
    def _finalize():
        acc = acc_ref[...]
        y_ref[...] = acc
        c_pad = acc.shape[1]
        s = jnp.broadcast_to(jnp.sum(acc, axis=0, keepdims=True), (8, c_pad))
        ss = jnp.broadcast_to(jnp.sum(acc * acc, axis=0, keepdims=True), (8, c_pad))
        row = jax.lax.broadcasted_iota(jnp.int32, (8, c_pad), 0)
        stats_ref[...] = jnp.where(row < 4, s, ss)     # sublanes 0-3: sum, 4-7: sumsq


def _bn_apply_kernel(*refs, relu, has_residual):
    """out = [relu]( y*scale + shift [+ residual] )  -- BN finalize / second pass."""
    if has_residual:
        y_ref, scale_ref, shift_ref, r_ref, o_ref = refs
    else:
        y_ref, scale_ref, shift_ref, o_ref = refs
    out = y_ref[...] * scale_ref[...] + shift_ref[...]
    if has_residual:
        out = out + r_ref[...]
    if relu:
        out = jnp.maximum(out, 0.0)
    o_ref[...] = out.astype(o_ref.dtype)


# --------------------------- pallas_call wrappers --------------------------- #

def _matmul_stats(p, w, tm, tk):
    m_pad, k_pad = p.shape
    c_pad = w.shape[1]
    nm, nk = m_pad // tm, k_pad // tk
    flops = 2 * m_pad * k_pad * c_pad
    bytes_accessed = (p.size * 2 + w.size * 2 + m_pad * c_pad * 4 + nm * 8 * c_pad * 4)
    return pl.pallas_call(
        _matmul_stats_kernel,
        out_shape=(jax.ShapeDtypeStruct((m_pad, c_pad), jnp.float32),
                   jax.ShapeDtypeStruct((nm * 8, c_pad), jnp.float32)),
        grid_spec=pltpu.PrefetchScalarGridSpec(
            num_scalar_prefetch=0,
            grid=(nm, nk),
            in_specs=[pl.BlockSpec((tm, tk), lambda i, k: (i, k)),
                      pl.BlockSpec((tk, c_pad), lambda i, k: (k, 0))],
            out_specs=[pl.BlockSpec((tm, c_pad), lambda i, k: (i, 0)),
                       pl.BlockSpec((8, c_pad), lambda i, k: (i, 0))],
            scratch_shapes=[pltpu.VMEM((tm, c_pad), jnp.float32)]),
        compiler_params=pltpu.CompilerParams(
            dimension_semantics=("parallel", "arbitrary"),
            vmem_limit_bytes=_VMEM_LIMIT),
        cost_estimate=pl.CostEstimate(flops=flops, transcendentals=0,
                                      bytes_accessed=bytes_accessed),
    )(p, w)


def _bn_apply(y, scale, shift, residual, relu, tm):
    m_pad, c_pad = y.shape
    nm = m_pad // tm
    args = [y, scale, shift]
    in_specs = [pl.BlockSpec((tm, c_pad), lambda i: (i, 0)),
                pl.BlockSpec((1, c_pad), lambda i: (0, 0)),
                pl.BlockSpec((1, c_pad), lambda i: (0, 0))]
    if residual is not None:
        args.append(residual)
        in_specs.append(pl.BlockSpec((tm, c_pad), lambda i: (i, 0)))
    kernel = functools.partial(_bn_apply_kernel, relu=relu,
                               has_residual=residual is not None)
    return pl.pallas_call(
        kernel,
        out_shape=jax.ShapeDtypeStruct((m_pad, c_pad), jnp.float32),
        grid_spec=pltpu.PrefetchScalarGridSpec(
            num_scalar_prefetch=0,
            grid=(nm,),
            in_specs=in_specs,
            out_specs=pl.BlockSpec((tm, c_pad), lambda i: (i, 0))),
        compiler_params=pltpu.CompilerParams(
            dimension_semantics=("parallel",),
            vmem_limit_bytes=_VMEM_LIMIT),
    )(*args)


# ------------------------------ BasicBlock --------------------------------- #

class BasicBlockPallas:
    """Pallas port of the PyTorch BasicBlock (training-mode BatchNorm)."""

    def __init__(self, in_planes, planes, stride=1, key=None):
        key = jax.random.PRNGKey(0) if key is None else key
        k1, k2, k3 = jax.random.split(key, 3)
        self.in_planes, self.planes, self.stride = in_planes, planes, stride
        self.c_pad = _round_up(planes, _LANE)

        # Conv weights in torch layout (Cout,Cin,kh,kw) kept in f32 for the
        # reference; padded bf16 matmul matrices precomputed once (hoisted out
        # of the forward pass).
        self.w1 = 0.1 * jax.random.normal(k1, (planes, in_planes, 3, 3), jnp.float32)
        self.w2 = 0.1 * jax.random.normal(k2, (planes, planes, 3, 3), jnp.float32)
        self.w1m = _w_to_padded_matrix(self.w1, self.c_pad)
        self.w2m = _w_to_padded_matrix(self.w2, self.c_pad)

        def _pad_c(v):
            return jnp.pad(v, (0, self.c_pad - planes))

        # BN affine params (torch default init: weight=1, bias=0), channel-padded
        # with zeros so padded output channels stay exactly 0.
        self.g1 = _pad_c(jnp.ones((planes,), jnp.float32))
        self.b1 = _pad_c(jnp.zeros((planes,), jnp.float32))
        self.g2 = _pad_c(jnp.ones((planes,), jnp.float32))
        self.b2 = _pad_c(jnp.zeros((planes,), jnp.float32))

        self.has_proj = (stride != 1) or (in_planes != planes)
        if self.has_proj:
            self.ws = 0.1 * jax.random.normal(k3, (planes, in_planes, 1, 1), jnp.float32)
            self.wsm = _w_to_padded_matrix(self.ws, self.c_pad)
            self.gs = _pad_c(jnp.ones((planes,), jnp.float32))
            self.bs = _pad_c(jnp.zeros((planes,), jnp.float32))

    # conv (as tiled matmul) -> training-mode BN -> optional residual/ReLU
    def _conv_bn(self, patches, w_mat, gamma, beta, m_valid, relu, residual=None):
        m, k = patches.shape
        k_pad, tk = _k_pad_and_tile(k)
        assert w_mat.shape[0] == k_pad
        c_pad = w_mat.shape[1]
        m_pad, tm = _m_pad_and_tile(m)

        p = _pad2d(patches.astype(jnp.bfloat16), m_pad, k_pad)
        y, stats = _matmul_stats(p, w_mat, tm, tk)

        # Combine per-M-tile partial sums.  Zero-padded rows contribute exactly
        # 0 to sum and sumsq, so we divide by the true row count m_valid.
        nm = m_pad // tm
        stats = stats.reshape(nm, 8, c_pad)
        s = jnp.sum(stats[:, 0, :], axis=0)
        ss = jnp.sum(stats[:, 4, :], axis=0)
        mean = s / m_valid
        var = jnp.maximum(ss / m_valid - mean * mean, 0.0)   # biased var (torch training BN)
        scale = gamma * jax.lax.rsqrt(var + _BN_EPS)
        shift = beta - mean * scale
        return _bn_apply(y, scale.reshape(1, c_pad), shift.reshape(1, c_pad),
                         residual, relu, tm)

    def __call__(self, x_nchw):
        n, c, h, w = x_nchw.shape
        assert c == self.in_planes
        x_f32 = jnp.transpose(x_nchw, (0, 2, 3, 1)).astype(jnp.float32)   # NHWC
        x_bf16 = x_f32.astype(jnp.bfloat16)

        # conv1 -> bn1 -> relu
        p1, ho, wo = _im2col(x_bf16, 3, self.stride, 1)
        m = n * ho * wo
        out1 = self._conv_bn(p1, self.w1m, self.g1, self.b1, m, relu=True)

        # shortcut branch
        if self.has_proj:
            ps, _, _ = _im2col(x_bf16, 1, self.stride, 0)
            sc = self._conv_bn(ps, self.wsm, self.gs, self.bs, m, relu=False)
        else:
            # identity shortcut: valid only when stride==1 and in_planes==planes
            assert self.stride == 1 and self.in_planes == self.planes
            assert ho == h and wo == w
            sc = _pad2d(x_f32.reshape(m, c), out1.shape[0], out1.shape[1])

        # conv2 -> bn2 -> (+ shortcut) -> relu
        out1_nhwc = out1[:m, :self.planes].astype(jnp.bfloat16).reshape(
            n, ho, wo, self.planes)
        p2, _, _ = _im2col(out1_nhwc, 3, 1, 1)
        out = self._conv_bn(p2, self.w2m, self.g2, self.b2, m,
                            relu=True, residual=sc)

        out = out[:m, :self.planes].reshape(n, ho, wo, self.planes)
        return jnp.transpose(out, (0, 3, 1, 2))   # back to NCHW


# -------------------------- pure-JAX reference ------------------------------ #

def _ref_block(block, x_nchw):
    p = block.planes

    def conv(x, w, stride, pad):
        return jax.lax.conv_general_dilated(
            x, w, (stride, stride), [(pad, pad), (pad, pad)],
            dimension_numbers=("NCHW", "OIHW", "NCHW"))

    def bn(x, g, b):
        mean = jnp.mean(x, axis=(0, 2, 3), keepdims=True)
        var = jnp.mean((x - mean) ** 2, axis=(0, 2, 3), keepdims=True)
        return ((x - mean) * jax.lax.rsqrt(var + _BN_EPS)
                * g.reshape(1, -1, 1, 1) + b.reshape(1, -1, 1, 1))

    out = jax.nn.relu(bn(conv(x_nchw, block.w1, block.stride, 1),
                         block.g1[:p], block.b1[:p]))
    out = bn(conv(out, block.w2, 1, 1), block.g2[:p], block.b2[:p])
    if block.has_proj:
        sc = bn(conv(x_nchw, block.ws, block.stride, 0), block.gs[:p], block.bs[:p])
    else:
        sc = x_nchw
    return jax.nn.relu(out + sc)


# --------------------------------- main ------------------------------------ #

if __name__ == "__main__":
    key = jax.random.PRNGKey(0)
    kx, kb1, kb2 = jax.random.split(key, 3)
    x = jax.random.normal(kx, (2, 4, 16, 16), jnp.float32)   # NCHW, PyTorch convention

    # Case 1: identity shortcut (stride=1, in_planes == planes).
    blk1 = BasicBlockPallas(4, 4, stride=1, key=kb1)
    y1 = jax.block_until_ready(blk1(x))
    assert y1.shape == (2, 4, 16, 16)
    np.testing.assert_allclose(np.asarray(y1), np.asarray(_ref_block(blk1, x)),
                               rtol=5e-2, atol=5e-2)

    # Case 2: projection shortcut (stride=2, channel change).
    blk2 = BasicBlockPallas(4, 8, stride=2, key=kb2)
    y2 = jax.block_until_ready(blk2(x))
    assert y2.shape == (2, 8, 8, 8)
    np.testing.assert_allclose(np.asarray(y2), np.asarray(_ref_block(blk2, x)),
                               rtol=5e-2, atol=5e-2)

    print("KERNEL_OK")
</pallas_src>

<mosaic_0001>
module attributes {stable_mosaic.version = 11 : i64} {
  func.func @_matmul_stats_kernel(%arg0: i32, %arg1: i32, %arg2: memref<256x128xbf16, #tpu.memory_space<vmem>>, %arg3: memref<128x128xbf16, #tpu.memory_space<vmem>>, %arg4: memref<256x128xf32, #tpu.memory_space<vmem>>, %arg5: memref<8x128xf32, #tpu.memory_space<vmem>>, %arg6: memref<256x128xf32, #tpu.memory_space<vmem>>) attributes {dimension_semantics = [#tpu.dimension_semantics<parallel>, #tpu.dimension_semantics<arbitrary>], iteration_bounds = array<i64: 2, 1>, scalar_prefetch = 0 : i64, scratch_operands = 1 : i64, tpu.core_type = #tpu.core_type<tc>, window_params = [{transform_indices = @transform_0, window_bounds = array<i64: 256, 128>}, {transform_indices = @transform_1, window_bounds = array<i64: 128, 128>}, {transform_indices = @transform_2, window_bounds = array<i64: 256, 128>}, {transform_indices = @transform_3, window_bounds = array<i64: 8, 128>}]} {
    %c0_i32 = arith.constant 0 : i32
    %0 = arith.cmpi eq, %arg1, %c0_i32 : i32
    %1 = arith.extui %0 : i1 to i32
    %c0_i32_0 = arith.constant 0 : i32
    %2 = arith.cmpi ne, %1, %c0_i32_0 : i32
    scf.if %2 {
      %cst_10 = arith.constant 0.000000e+00 : f32
      %12 = vector.broadcast %cst_10 : f32 to vector<256x128xf32>
      %c0_11 = arith.constant 0 : index
      %c0_12 = arith.constant 0 : index
      %13 = vector.load %arg6[%c0_11, %c0_12] : memref<256x128xf32, #tpu.memory_space<vmem>>, vector<256x128xf32>
      tpu.vector_store %arg6[%c0_11, %c0_12], %12 {strides = array<i32>} : memref<256x128xf32, #tpu.memory_space<vmem>>, vector<256x128xf32>,
    } else {
    }
    %c0 = arith.constant 0 : index
    %c0_1 = arith.constant 0 : index
    %3 = vector.load %arg6[%c0, %c0_1] : memref<256x128xf32, #tpu.memory_space<vmem>>, vector<256x128xf32>
    %c0_2 = arith.constant 0 : index
    %c0_3 = arith.constant 0 : index
    %4 = vector.load %arg2[%c0_2, %c0_3] : memref<256x128xbf16, #tpu.memory_space<vmem>>, vector<256x128xbf16>
    %c0_4 = arith.constant 0 : index
    %c0_5 = arith.constant 0 : index
    %5 = vector.load %arg3[%c0_4, %c0_5] : memref<128x128xbf16, #tpu.memory_space<vmem>>, vector<128x128xbf16>
    %cst = arith.constant dense<0.000000e+00> : vector<256x128xf32>
    %6 = tpu.matmul %4, %5, %cst {dimension_numbers = #tpu.dot_dimension_numbers<[1], [0], [0], [1], [0, 0, 1, 1], [], []>} : vector<256x128xbf16>, vector<128x128xbf16>, vector<256x128xf32> -> vector<256x128xf32>
    %7 = arith.addf %3, %6 : vector<256x128xf32>
    %c0_6 = arith.constant 0 : index
    %c0_7 = arith.constant 0 : index
    %8 = vector.load %arg6[%c0_6, %c0_7] : memref<256x128xf32, #tpu.memory_space<vmem>>, vector<256x128xf32>
    tpu.vector_store %arg6[%c0_6, %c0_7], %7 {strides = array<i32>} : memref<256x128xf32, #tpu.memory_space<vmem>>, vector<256x128xf32>,
    %c0_i32_8 = arith.constant 0 : i32
    %9 = arith.cmpi eq, %arg1, %c0_i32_8 : i32
    %10 = arith.extui %9 : i1 to i32
    %c0_i32_9 = arith.constant 0 : i32
    %11 = arith.cmpi ne, %10, %c0_i32_9 : i32
    scf.if %11 {
      %c0_10 = arith.constant 0 : index
      %c0_11 = arith.constant 0 : index
      %12 = vector.load %arg6[%c0_10, %c0_11] : memref<256x128xf32, #tpu.memory_space<vmem>>, vector<256x128xf32>
      %c0_12 = arith.constant 0 : index
      %c0_13 = arith.constant 0 : index
      %13 = vector.load %arg4[%c0_12, %c0_13] : memref<256x128xf32, #tpu.memory_space<vmem>>, vector<256x128xf32>
      tpu.vector_store %arg4[%c0_12, %c0_13], %12 {strides = array<i32>} : memref<256x128xf32, #tpu.memory_space<vmem>>, vector<256x128xf32>,
      %cst_14 = arith.constant dense<0.000000e+00> : vector<128xf32>
      %14 = vector.multi_reduction <add>, %12, %cst_14 [0] : vector<256x128xf32> to vector<128xf32>
      %15 = vector.shape_cast %14 : vector<128xf32> to vector<1x128xf32>
      %16 = vector.shape_cast %15 : vector<1x128xf32> to vector<1x128xf32>
      %17 = vector.broadcast %16 : vector<1x128xf32> to vector<8x128xf32>
      %18 = arith.mulf %12, %12 : vector<256x128xf32>
      %cst_15 = arith.constant dense<0.000000e+00> : vector<128xf32>
      %19 = vector.multi_reduction <add>, %18, %cst_15 [0] : vector<256x128xf32> to vector<128xf32>
      %20 = vector.shape_cast %19 : vector<128xf32> to vector<1x128xf32>
      %21 = vector.shape_cast %20 : vector<1x128xf32> to vector<1x128xf32>
      %22 = vector.broadcast %21 : vector<1x128xf32> to vector<8x128xf32>
      %23 = tpu.iota {dimensions = array<i32: 0>} : vector<8x128xi32>
      %c4_i32 = arith.constant 4 : i32
      %24 = vector.broadcast %c4_i32 : i32 to vector<8x128xi32>
      %25 = arith.cmpi slt, %23, %24 : vector<8x128xi32>
      %26 = arith.select %25, %17, %22 : vector<8x128xi1>, vector<8x128xf32>
      %c0_16 = arith.constant 0 : index
      %c0_17 = arith.constant 0 : index
      %27 = vector.load %arg5[%c0_16, %c0_17] : memref<8x128xf32, #tpu.memory_space<vmem>>, vector<8x128xf32>
      tpu.vector_store %arg5[%c0_16, %c0_17], %26 {strides = array<i32>} : memref<8x128xf32, #tpu.memory_space<vmem>>, vector<8x128xf32>,
    } else {
    }
    return
  }
  func.func @transform_0(%arg0: i32, %arg1: i32) -> (i32, i32) {
    %c0_i32 = arith.constant 0 : i32
    return %arg0, %arg1 : i32, i32
  }
  func.func @transform_1(%arg0: i32, %arg1: i32) -> (i32, i32) {
    %c0_i32 = arith.constant 0 : i32
    %c0_i32_0 = arith.constant 0 : i32
    return %arg1, %c0_i32 : i32, i32
  }
  func.func @transform_2(%arg0: i32, %arg1: i32) -> (i32, i32) {
    %c0_i32 = arith.constant 0 : i32
    %c0_i32_0 = arith.constant 0 : i32
    return %arg0, %c0_i32 : i32, i32
  }
  func.func @transform_3(%arg0: i32, %arg1: i32) -> (i32, i32) {
    %c0_i32 = arith.constant 0 : i32
    %c0_i32_0 = arith.constant 0 : i32
    return %arg0, %c0_i32 : i32, i32
  }
}

</mosaic_0001>

<llo_original>
// kernel: tpu_custom_call.1
$region0: #{tpu_custom_call.1}
  #allocation0 [shape = 'u32[]', space=smem, size = 0x4, offset = 0x4, fixed_abs, tag = 'smem constant byte address 0x4 - core index']
  #allocation1 [shape = 'u32[144,128]{1,0:T(1,128)}', space=vmem, size = 0x12000, scoped, tag = 'internal scratch']
  #allocation2 [shape = 'f32[256,128]{1,0:T(8,128)}', space=vmem, size = 0x20000, scoped, tag = 'scratch operand']
  %s0 = inlined_call_operand.hbm [shape: bf16[512,128], index: 0, kind: input, shape index: {}]
  %s1 = inlined_call_operand.hbm [shape: bf16[128,128], index: 1, kind: input, shape index: {}]
  %s2 = inlined_call_operand.hbm [shape: f32[512,128], index: 2, kind: output, shape index: {0}]
  %s3 = inlined_call_operand.hbm [shape: f32[16,128], index: 3, kind: output, shape index: {1}]
  %4 = xla_tuple %s2, %s3
  %s5 = sld [smem:[#allocation0]]
  $region65: #{tpu_custom_call.1} parent=0
    _
  %s7 = ssub.s32 1, %s5
  %s8 = scalar_select 0, %s7, %s5
  $region1: #{tpu_custom_call.1} parent=0
    #allocation3 [shape = 'u8[131072]{0}', space=vmem, size = 0x20000, scoped, tag = 'input window, operand 0']
    #allocation4 [shape = 's32[2]{0}', space=sflag, size = 0x8, scoped, tag = 'scoped memory for tpu_custom_call.1']
    #allocation5 [shape = 's32[2]{0}', space=sflag, size = 0x8, scoped, tag = 'scoped memory for tpu_custom_call.1']
    #allocation6 [shape = 'u8[32768]{0}', space=vmem, size = 0x8000, scoped, tag = 'input window, operand 1, single buffered']
    #allocation7 [shape = 's32[1]{0}', space=sflag, size = 0x4, scoped, tag = 'scoped memory for tpu_custom_call.1']
    #allocation8 [shape = 'u8[262144]{0}', space=vmem, size = 0x40000, scoped, tag = 'output window, operand 0']
    #allocation9 [shape = 'u8[8192]{0}', space=vmem, size = 0x2000, scoped, tag = 'output window, operand 1']
    #allocation10 [shape = 's32[2]{0}', space=sflag, size = 0x8, scoped, tag = 'scoped memory for tpu_custom_call.1']
    %9 = vsyncpa [#allocation4], 0
    %s10 = scalar_lea.sflag [#allocation4], 1
    %11 = vsyncpa %s10, 0
    %12 = vsyncpa [#allocation7], 0
    %13 = vsyncpa [#allocation5], 0
    %s14 = scalar_lea.sflag [#allocation5], 1
    %15 = vsyncpa %s14, 0
    %16 = vsyncpa [#allocation10], 0
    %s17 = scalar_lea.sflag [#allocation10], 1
    %18 = vsyncpa %s17, 0
    loop: start=0, step=1, limit=4
    $region2: #{tpu_custom_call.1} parent=1 // loop_pre_header
      _
    $region3: #{tpu_custom_call.1} parent=1 // loop_header
      %s20 = sphi 0, %s24
      %p21 = scmp.ge.s32.totalorder %s20, 4
      %s27 = sphi 0, %s39
      %s28 = sphi 0, %s35
      %s29 = sphi 0, %s27
      %s30 = sphi 0, %s28
      %s31 = sphi 0, %s29
      %s32 = sphi 0, %s30
      %s44 = sphi 0, %s46
      %s47 = sphi 0, %s44
      %s48 = sphi 0, %s47
      %s64 = sphi 0, %s48
      %s70 = sphi 0, %s72
      %s73 = sphi 0, %s70
      %s74 = sphi 0, %s73
      %s90 = sphi 0, %s74
      %s96 = sphi 0, %s98
      %s99 = sphi 0, %s96
      %s100 = sphi 0, %s99
      %s116 = sphi 0, %s100
      %s122 = sphi 0, %s124
      %s125 = sphi 0, %s122
      %s126 = sphi 0, %s125
      %s142 = sphi 0, %s126
    $region4: #{tpu_custom_call.1} parent=1 // loop_header_branch
      %23 = sbr.rel (%p21) target = $region8
    $region5: #{tpu_custom_call.1} parent=1 // loop_body
      %s25 = ssub.s32 %s20, 1
      %s26 = ssub.s32 %s20, 2
      %s33 = sadd.s32 1, %s28
      %p34 = scmp.ge.s32.totalorder %s33, 1
      %s35 = scalar_select %p34, 0, %s33
      %s36 = sadd.s32 1, %s27
      %s37 = scalar_select %p34, %s36, %s27
      %p38 = scmp.ge.s32.totalorder %s37, 2
      %s39 = scalar_select %p38, 0, %s37
      %s40 = ssub.s32 %s27, %s39
      %s41 = ssub.s32 %s28, %s35
      %s42 = sor.u32 %s40, %s41
      %p43 = scmp.eq.s32.totalorder %s42, 0
      %s45 = sadd.s32 %s44, 1
      %s46 = scalar_select %p43, %s44, %s45
      %p49 = pneg %p43
      %p50 = scmp.eq.s32.totalorder %s20, 1
      %p51 = por %p49, %p50
      %p52 = scmp.ne.s32.totalorder %s44, %s47
      %p53 = scmp.eq.s32.totalorder %s20, 0
      %p54 = por %p52, %p53
      %p55 = scmp.ne.s32.totalorder %s44, %s47
      %p56 = scmp.eq.s32.totalorder %s25, 1
      %p57 = por %p55, %p56
      %p58 = scmp.ne.s32.totalorder %s47, %s48
      %p59 = scmp.eq.s32.totalorder %s25, 0
      %p60 = por %p58, %p59
      %p61 = scmp.ne.s32.totalorder %s47, %s48
      %p62 = scmp.eq.s32.totalorder %s26, 1
      %p63 = por %p61, %p62
      %p65 = scmp.ne.s32.totalorder %s48, %s64
      %p66 = scmp.eq.s32.totalorder %s26, 0
      %p67 = por %p65, %p66
      %s68 = ssub.s32 %s28, %s35
      %p69 = scmp.eq.s32.totalorder %s68, 0
      %s71 = sadd.s32 %s70, 1
      %s72 = scalar_select %p69, %s70, %s71
      %p75 = pneg %p69
      %p76 = scmp.eq.s32.totalorder %s20, 1
      %p77 = por %p75, %p76
      %p78 = scmp.ne.s32.totalorder %s70, %s73
      %p79 = scmp.eq.s32.totalorder %s20, 0
      %p80 = por %p78, %p79
      %p81 = scmp.ne.s32.totalorder %s70, %s73
      %p82 = scmp.eq.s32.totalorder %s25, 1
      %p83 = por %p81, %p82
      %p84 = scmp.ne.s32.totalorder %s73, %s74
      %p85 = scmp.eq.s32.totalorder %s25, 0
      %p86 = por %p84, %p85
      %p87 = scmp.ne.s32.totalorder %s73, %s74
      %p88 = scmp.eq.s32.totalorder %s26, 1
      %p89 = por %p87, %p88
      %p91 = scmp.ne.s32.totalorder %s74, %s90
      %p92 = scmp.eq.s32.totalorder %s26, 0
      %p93 = por %p91, %p92
      %s94 = ssub.s32 %s27, %s39
      %p95 = scmp.eq.s32.totalorder %s94, 0
      %s97 = sadd.s32 %s96, 1
      %s98 = scalar_select %p95, %s96, %s97
      %p101 = pneg %p95
      %p102 = scmp.eq.s32.totalorder %s20, 1
      %p103 = por %p101, %p102
      %p104 = scmp.ne.s32.totalorder %s96, %s99
      %p105 = scmp.eq.s32.totalorder %s20, 0
      %p106 = por %p104, %p105
      %p107 = scmp.ne.s32.totalorder %s96, %s99
      %p108 = scmp.eq.s32.totalorder %s25, 1
      %p109 = por %p107, %p108
      %p110 = scmp.ne.s32.totalorder %s99, %s100
      %p111 = scmp.eq.s32.totalorder %s25, 0
      %p112 = por %p110, %p111
      %p113 = scmp.ne.s32.totalorder %s99, %s100
      %p114 = scmp.eq.s32.totalorder %s26, 1
      %p115 = por %p113, %p114
      %p117 = scmp.ne.s32.totalorder %s100, %s116
      %p118 = scmp.eq.s32.totalorder %s26, 0
      %p119 = por %p117, %p118
      %s120 = ssub.s32 %s27, %s39
      %p121 = scmp.eq.s32.totalorder %s120, 0
      %s123 = sadd.s32 %s122, 1
      %s124 = scalar_select %p121, %s122, %s123
      %p127 = pneg %p121
      %p128 = scmp.eq.s32.totalorder %s20, 1
      %p129 = por %p127, %p128
      %p130 = scmp.ne.s32.totalorder %s122, %s125
      %p131 = scmp.eq.s32.totalorder %s20, 0
      %p132 = por %p130, %p131
      %p133 = scmp.ne.s32.totalorder %s122, %s125
      %p134 = scmp.eq.s32.totalorder %s25, 1
      %p135 = por %p133, %p134
      %p136 = scmp.ne.s32.totalorder %s125, %s126
      %p137 = scmp.eq.s32.totalorder %s25, 0
      %p138 = por %p136, %p137
      %p139 = scmp.ne.s32.totalorder %s125, %s126
      %p140 = scmp.eq.s32.totalorder %s26, 1
      %p141 = por %p139, %p140
      %p143 = scmp.ne.s32.totalorder %s126, %s142
      %p144 = scmp.eq.s32.totalorder %s26, 0
      %p145 = por %p143, %p144
      %p146 = scmp.le.s32.totalorder 1, %s20
      %p147 = scmp.lt.s32.totalorder %s20, 3
      %p148 = pnand %p146, %p147
      %p149 = pneg %p148
      // Predicated region
      $region9: #{tpu_custom_call.1} parent=5 // pred_check
        _
      $region10: #{tpu_custom_call.1} parent=5 // pred_check_branch
        %151 = sbr.rel (%p148) target = $region12
      $region11: #{tpu_custom_call.1} parent=5 // pred_region
        %s152 = ssub.s32 %s20, 1
        // Predicated region
        $region13: #{tpu_custom_call.1} parent=11 // pred_check
          %p153 = pneg %p86
        $region14: #{tpu_custom_call.1} parent=11 // pred_check_branch
          %155 = sbr.rel (%p153) target = $region16
        $region15: #{tpu_custom_call.1} parent=11 // pred_region
          %s156 = smul.u32 16, %s30
          %s158 = ssub.s32 1024, 1024
          %159 = vsyncadd [#allocation7], %s158
          %s160 = smul.addr %s156, 64
          %s161 = scalar_lea.hbm %s1, %s160
          %s162 = sshll.u32 [#allocation6], 4
          %s163 = int_to_ptr.vmem [resolvable:$true] %s162
          %168 = dma.hbm_to_vmem [thread:$0]  %s161, 1024, %s163, [#allocation7], 64, 64, 4
        $region16: #{tpu_custom_call.1} parent=11 // pred_fallthru
          _
      $region12: #{tpu_custom_call.1} parent=5 // pred_fallthru
        _
      %p169 = scmp.lt.s32.totalorder %s20, 2
      // Predicated region
      $region17: #{tpu_custom_call.1} parent=5 // pred_check
        %p170 = pneg %p169
      $region18: #{tpu_custom_call.1} parent=5 // pred_check_branch
        %172 = sbr.rel (%p170) target = $region20
      $region19: #{tpu_custom_call.1} parent=5 // pred_region
        // Predicated region
        $region21: #{tpu_custom_call.1} parent=19 // pred_check
          %p173 = pneg %p54
        $region22: #{tpu_custom_call.1} parent=19 // pred_check_branch
          %175 = sbr.rel (%p173) target = $region24
        $region23: #{tpu_custom_call.1} parent=19 // pred_region
          %s176 = sand.u32 %s44, 1
          %s177 = scalar_lea.sflag [#allocation4], %s176
          %s178 = sand.u32 %s44, 1
          %s179 = smul.addr %s178, 128
          %s180 = scalar_lea.vmem [#allocation3], %s179
          %s181 = smul.u32 32, %s27
          %s183 = ssub.s32 2048, 2048
          %184 = vsyncadd %s177, %s183
          %s185 = sadd.s32 %s28, %s181
          %s186 = smul.addr %s185, 64
          %s187 = scalar_lea.hbm %s0, %s186
          %s188 = sshll.u32 %s180, 4
          %s189 = int_to_ptr.vmem [resolvable:$true] %s188
          %194 = dma.hbm_to_vmem [thread:$0]  %s187, 2048, %s189, %s177, 64, 64, 4
        $region24: #{tpu_custom_call.1} parent=19 // pred_fallthru
          _
      $region20: #{tpu_custom_call.1} parent=5 // pred_fallthru
        _
      %p195 = scmp.le.s32.totalorder 1, %s20
      %p196 = scmp.lt.s32.totalorder %s20, 3
      %p197 = pnand %p195, %p196
      %p198 = pneg %p197
      // Predicated region
      $region25: #{tpu_custom_call.1} parent=5 // pred_check
        _
      $region26: #{tpu_custom_call.1} parent=5 // pred_check_branch
        %200 = sbr.rel (%p197) target = $region28
      $region27: #{tpu_custom_call.1} parent=5 // pred_region
        %s201 = ssub.s32 %s20, 1
        %s202 = sand.u32 %s47, 1
        %s203 = scalar_lea.sflag [#allocation4], %s202
        %s204 = sand.u32 %s47, 1
        %s205 = smul.addr %s204, 128
        %s206 = scalar_lea.vmem [#allocation3], %s205
        // Predicated region
        $region29: #{tpu_custom_call.1} parent=27 // pred_check
          %p207 = pneg %p60
        $region30: #{tpu_custom_call.1} parent=27 // pred_check_branch
          %209 = sbr.rel (%p207) target = $region32
        $region31: #{tpu_custom_call.1} parent=27 // pred_region
          %210 = dma.done %s203, 2048
        $region32: #{tpu_custom_call.1} parent=27 // pred_fallthru
          _
        // Predicated region
        $region33: #{tpu_custom_call.1} parent=27 // pred_check
          %p211 = pneg %p86
        $region34: #{tpu_custom_call.1} parent=27 // pred_check_branch
          %213 = sbr.rel (%p211) target = $region36
        $region35: #{tpu_custom_call.1} parent=27 // pred_region
          %214 = dma.done [#allocation7], 1024
        $region36: #{tpu_custom_call.1} parent=27 // pred_fallthru
          _
        %s215 = sand.u32 %s47, 1
        %s216 = scalar_lea.sflag [#allocation4], %s215
        %s217 = sand.u32 %s47, 1
        %s218 = smul.addr %s217, 128
        %s219 = scalar_lea.vmem [#allocation3], %s218
        %p220 = pneg %p60
        %p221 = pneg %p57
        %p222 = pneg %p86
        %p223 = pneg %p83
        %p224 = pneg %p112
        %p225 = pneg %p109
        %s226 = sand.u32 %s99, 1
        %s227 = scalar_lea.sflag [#allocation5], %s226
        %s228 = sand.u32 %s99, 1
        %s229 = smul.addr %s228, 256
        %s230 = scalar_lea.vmem [#allocation8], %s229
        %p231 = pneg %p138
        %p232 = pneg %p135
        %s233 = sand.u32 %s125, 1
        %s234 = scalar_lea.sflag [#allocation10], %s233
        %s235 = sand.u32 %s125, 1
        %s236 = smul.addr %s235, 8
        %s237 = scalar_lea.vmem [#allocation9], %s236
        %s238 = smul.u32 32, %s29
        %s239 = smul.u32 16, %s30
        %s240 = smul.u32 32, %s29
        %p242 = scmp.eq.s32.totalorder %s30, 0
        // Predicated region
        $region37: #{tpu_custom_call.1} parent=27 // pred_check
          %p243 = pneg %p242
        $region38: #{tpu_custom_call.1} parent=27 // pred_check_branch
          %245 = sbr.rel (%p243) target = $region40
        $region39: #{tpu_custom_call.1} parent=27 // pred_region
          %246 = vst [vmem:[#allocation2] sm:$0xff] 0.0
          %247 = vst [vmem:[#allocation2 + $0x8] sm:$0xff] 0.0
          %248 = vst [vmem:[#allocation2 + $0x10] sm:$0xff] 0.0
          %249 = vst [vmem:[#allocation2 + $0x18] sm:$0xff] 0.0
          %250 = vst [vmem:[#allocation2 + $0x20] sm:$0xff] 0.0
          %251 = vst [vmem:[#allocation2 + $0x28] sm:$0xff] 0.0
          %252 = vst [vmem:[#allocation2 + $0x30] sm:$0xff] 0.0
          %253 = vst [vmem:[#allocation2 + $0x38] sm:$0xff] 0.0
          %254 = vst [vmem:[#allocation2 + $0x40] sm:$0xff] 0.0
          %255 = vst [vmem:[#allocation2 + $0x48] sm:$0xff] 0.0
          %256 = vst [vmem:[#allocation2 + $0x50] sm:$0xff] 0.0
          %257 = vst [vmem:[#allocation2 + $0x58] sm:$0xff] 0.0
          %258 = vst [vmem:[#allocation2 + $0x60] sm:$0xff] 0.0
          %259 = vst [vmem:[#allocation2 + $0x68] sm:$0xff] 0.0
          %260 = vst [vmem:[#allocation2 + $0x70] sm:$0xff] 0.0
          %261 = vst [vmem:[#allocation2 + $0x78] sm:$0xff] 0.0
          %262 = vst [vmem:[#allocation2 + $0x80] sm:$0xff] 0.0
          %263 = vst [vmem:[#allocation2 + $0x88] sm:$0xff] 0.0
          %264 = vst [vmem:[#allocation2 + $0x90] sm:$0xff] 0.0
          %265 = vst [vmem:[#allocation2 + $0x98] sm:$0xff] 0.0
          %266 = vst [vmem:[#allocation2 + $0xa0] sm:$0xff] 0.0
          %267 = vst [vmem:[#allocation2 + $0xa8] sm:$0xff] 0.0
          %268 = vst [vmem:[#allocation2 + $0xb0] sm:$0xff] 0.0
          %269 = vst [vmem:[#allocation2 + $0xb8] sm:$0xff] 0.0
          %270 = vst [vmem:[#allocation2 + $0xc0] sm:$0xff] 0.0
          %271 = vst [vmem:[#allocation2 + $0xc8] sm:$0xff] 0.0
          %272 = vst [vmem:[#allocation2 + $0xd0] sm:$0xff] 0.0
          %273 = vst [vmem:[#allocation2 + $0xd8] sm:$0xff] 0.0
          %274 = vst [vmem:[#allocation2 + $0xe0] sm:$0xff] 0.0
          %275 = vst [vmem:[#allocation2 + $0xe8] sm:$0xff] 0.0
          %276 = vst [vmem:[#allocation2 + $0xf0] sm:$0xff] 0.0
          %277 = vst [vmem:[#allocation2 + $0xf8] sm:$0xff] 0.0
        $region40: #{tpu_custom_call.1} parent=27 // pred_fallthru
          _
        %v278 = vld [vmem:[#allocation2] sm:$0xff]
        %v279 = vld [vmem:[#allocation2 + $0x8] sm:$0xff]
        %v280 = vld [vmem:[#allocation2 + $0x10] sm:$0xff]
        %v281 = vld [vmem:[#allocation2 + $0x18] sm:$0xff]
        %v282 = vld [vmem:[#allocation2 + $0x20] sm:$0xff]
        %v283 = vld [vmem:[#allocation2 + $0x28] sm:$0xff]
        %v284 = vld [vmem:[#allocation2 + $0x30] sm:$0xff]
        %v285 = vld [vmem:[#allocation2 + $0x38] sm:$0xff]
        %v286 = vld [vmem:[#allocation2 + $0x40] sm:$0xff]
        %v287 = vld [vmem:[#allocation2 + $0x48] sm:$0xff]
        %v288 = vld [vmem:[#allocation2 + $0x50] sm:$0xff]
        %v289 = vld [vmem:[#allocation2 + $0x58] sm:$0xff]
        %v290 = vld [vmem:[#allocation2 + $0x60] sm:$0xff]
        %v291 = vld [vmem:[#allocation2 + $0x68] sm:$0xff]
        %v292 = vld [vmem:[#allocation2 + $0x70] sm:$0xff]
        %v293 = vld [vmem:[#allocation2 + $0x78] sm:$0xff]
        %v294 = vld [vmem:[#allocation2 + $0x80] sm:$0xff]
        %v295 = vld [vmem:[#allocation2 + $0x88] sm:$0xff]
        %v296 = vld [vmem:[#allocation2 + $0x90] sm:$0xff]
        %v297 = vld [vmem:[#allocation2 + $0x98] sm:$0xff]
        %v298 = vld [vmem:[#allocation2 + $0xa0] sm:$0xff]
        %v299 = vld [vmem:[#allocation2 + $0xa8] sm:$0xff]
        %v300 = vld [vmem:[#allocation2 + $0xb0] sm:$0xff]
        %v301 = vld [vmem:[#allocation2 + $0xb8] sm:$0xff]
        %v302 = vld [vmem:[#allocation2 + $0xc0] sm:$0xff]
        %v303 = vld [vmem:[#allocation2 + $0xc8] sm:$0xff]
        %v304 = vld [vmem:[#allocation2 + $0xd0] sm:$0xff]
        %v305 = vld [vmem:[#allocation2 + $0xd8] sm:$0xff]
        %v306 = vld [vmem:[#allocation2 + $0xe0] sm:$0xff]
        %v307 = vld [vmem:[#allocation2 + $0xe8] sm:$0xff]
        %v308 = vld [vmem:[#allocation2 + $0xf0] sm:$0xff]
        %v309 = vld [vmem:[#allocation2 + $0xf8] sm:$0xff]
        %v310 = vld [vmem:[%s206] sm:$0xf]
        %v311 = vld [vmem:[%s206 + $0x4] sm:$0xf]
        %v312 = vld [vmem:[%s206 + $0x8] sm:$0xf]
        %v313 = vld [vmem:[%s206 + $0xc] sm:$0xf]
        %v314 = vld [vmem:[%s206 + $0x10] sm:$0xf]
        %v315 = vld [vmem:[%s206 + $0x14] sm:$0xf]
        %v316 = vld [vmem:[%s206 + $0x18] sm:$0xf]
        %v317 = vld [vmem:[%s206 + $0x1c] sm:$0xf]
        %v318 = vld [vmem:[%s206 + $0x20] sm:$0xf]
        %v319 = vld [vmem:[%s206 + $0x24] sm:$0xf]
        %v320 = vld [vmem:[%s206 + $0x28] sm:$0xf]
        %v321 = vld [vmem:[%s206 + $0x2c] sm:$0xf]
        %v322 = vld [vmem:[%s206 + $0x30] sm:$0xf]
        %v323 = vld [vmem:[%s206 + $0x34] sm:$0xf]
        %v324 = vld [vmem:[%s206 + $0x38] sm:$0xf]
        %v325 = vld [vmem:[%s206 + $0x3c] sm:$0xf]
        %v326 = vld [vmem:[%s206 + $0x40] sm:$0xf]
        %v327 = vld [vmem:[%s206 + $0x44] sm:$0xf]
        %v328 = vld [vmem:[%s206 + $0x48] sm:$0xf]
        %v329 = vld [vmem:[%s206 + $0x4c] sm:$0xf]
        %v330 = vld [vmem:[%s206 + $0x50] sm:$0xf]
        %v331 = vld [vmem:[%s206 + $0x54] sm:$0xf]
        %v332 = vld [vmem:[%s206 + $0x58] sm:$0xf]
        %v333 = vld [vmem:[%s206 + $0x5c] sm:$0xf]
        %v334 = vld [vmem:[%s206 + $0x60] sm:$0xf]
        %v335 = vld [vmem:[%s206 + $0x64] sm:$0xf]
        %v336 = vld [vmem:[%s206 + $0x68] sm:$0xf]
        %v337 = vld [vmem:[%s206 + $0x6c] sm:$0xf]
        %v338 = vld [vmem:[%s206 + $0x70] sm:$0xf]
        %v339 = vld [vmem:[%s206 + $0x74] sm:$0xf]
        %v340 = vld [vmem:[%s206 + $0x78] sm:$0xf]
        %v341 = vld [vmem:[%s206 + $0x7c] sm:$0xf]
        %v342 = vld [vmem:[#allocation6] sm:$0xf]
        %v343 = vld [vmem:[#allocation6 + $0x4] sm:$0xf]
        %v344 = vld [vmem:[#allocation6 + $0x8] sm:$0xf]
        %v345 = vld [vmem:[#allocation6 + $0xc] sm:$0xf]
        %v346 = vld [vmem:[#allocation6 + $0x10] sm:$0xf]
        %v347 = vld [vmem:[#allocation6 + $0x14] sm:$0xf]
        %v348 = vld [vmem:[#allocation6 + $0x18] sm:$0xf]
        %v349 = vld [vmem:[#allocation6 + $0x1c] sm:$0xf]
        %v350 = vld [vmem:[#allocation6 + $0x20] sm:$0xf]
        %v351 = vld [vmem:[#allocation6 + $0x24] sm:$0xf]
        %v352 = vld [vmem:[#allocation6 + $0x28] sm:$0xf]
        %v353 = vld [vmem:[#allocation6 + $0x2c] sm:$0xf]
        %v354 = vld [vmem:[#allocation6 + $0x30] sm:$0xf]
        %v355 = vld [vmem:[#allocation6 + $0x34] sm:$0xf]
        %v356 = vld [vmem:[#allocation6 + $0x38] sm:$0xf]
        %v357 = vld [vmem:[#allocation6 + $0x3c] sm:$0xf]
        %v390 = vunpack.c.l.b16 %v310
        %v391 = vunpack.c.l.b16 %v311
        %v392 = vunpack.c.l.b16 %v312
        %v393 = vunpack.c.l.b16 %v313
        %v394 = vunpack.c.l.b16 %v314
        %v395 = vunpack.c.l.b16 %v315
        %v396 = vunpack.c.l.b16 %v316
        %v397 = vunpack.c.l.b16 %v317
        %v398 = vunpack.c.l.b16 %v318
        %v399 = vunpack.c.l.b16 %v319
        %v400 = vunpack.c.l.b16 %v320
        %v401 = vunpack.c.l.b16 %v321
        %v402 = vunpack.c.l.b16 %v322
        %v403 = vunpack.c.l.b16 %v323
        %v404 = vunpack.c.l.b16 %v324
        %v405 = vunpack.c.l.b16 %v325
        %v406 = vunpack.c.l.b16 %v326
        %v407 = vunpack.c.l.b16 %v327
        %v408 = vunpack.c.l.b16 %v328
        %v409 = vunpack.c.l.b16 %v329
        %v410 = vunpack.c.l.b16 %v330
        %v411 = vunpack.c.l.b16 %v331
        %v412 = vunpack.c.l.b16 %v332
        %v413 = vunpack.c.l.b16 %v333
        %v414 = vunpack.c.l.b16 %v334
        %v415 = vunpack.c.l.b16 %v335
        %v416 = vunpack.c.l.b16 %v336
        %v417 = vunpack.c.l.b16 %v337
        %v418 = vunpack.c.l.b16 %v338
        %v419 = vunpack.c.l.b16 %v339
        %v420 = vunpack.c.l.b16 %v340
        %v421 = vunpack.c.l.b16 %v341
        %v422 = vpack.c.b16 %v391, %v390
        %v423 = vpack.c.b16 %v393, %v392
        %v424 = vpack.c.b16 %v395, %v394
        %v425 = vpack.c.b16 %v397, %v396
        %v426 = vpack.c.b16 %v399, %v398
        %v427 = vpack.c.b16 %v401, %v400
        %v428 = vpack.c.b16 %v403, %v402
        %v429 = vpack.c.b16 %v405, %v404
        %v430 = vpack.c.b16 %v407, %v406
        %v431 = vpack.c.b16 %v409, %v408
        %v432 = vpack.c.b16 %v411, %v410
        %v433 = vpack.c.b16 %v413, %v412
        %v434 = vpack.c.b16 %v415, %v414
        %v435 = vpack.c.b16 %v417, %v416
        %v436 = vpack.c.b16 %v419, %v418
        %v437 = vpack.c.b16 %v421, %v420
        %v470 = vunpack.c.l.b16 %v342
        %v471 = vunpack.c.l.b16 %v343
        %v472 = vunpack.c.l.b16 %v344
        %v473 = vunpack.c.l.b16 %v345
        %v474 = vunpack.c.l.b16 %v346
        %v475 = vunpack.c.l.b16 %v347
        %v476 = vunpack.c.l.b16 %v348
        %v477 = vunpack.c.l.b16 %v349
        %v478 = vunpack.c.l.b16 %v350
        %v479 = vunpack.c.l.b16 %v351
        %v480 = vunpack.c.l.b16 %v352
        %v481 = vunpack.c.l.b16 %v353
        %v482 = vunpack.c.l.b16 %v354
        %v483 = vunpack.c.l.b16 %v355
        %v484 = vunpack.c.l.b16 %v356
        %v485 = vunpack.c.l.b16 %v357
        %v486 = vpack.c.b16 %v471, %v470
        %v487 = vpack.c.b16 %v473, %v472
        %v488 = vpack.c.b16 %v475, %v474
        %v489 = vpack.c.b16 %v477, %v476
        %v490 = vpack.c.b16 %v479, %v478
        %v491 = vpack.c.b16 %v481, %v480
        %v492 = vpack.c.b16 %v483, %v482
        %v493 = vpack.c.b16 %v485, %v484
        %502 = vmatprep.subr.bf16.mxu0 0
        %503 = vmatpush1.bf16.msra.mxu0 %v493
        %504 = vmatprep.subr.bf16.mxu0 0
        %505 = vmatpush1.bf16.msra.mxu0 %v492
        %506 = vmatprep.subr.bf16.mxu0 0
        %507 = vmatpush1.bf16.msra.mxu0 %v491
        %508 = vmatprep.subr.bf16.mxu0 0
        %509 = vmatpush1.bf16.msra.mxu0 %v490
        %510 = vmatprep.subr.bf16.mxu0 0
        %511 = vmatpush1.bf16.msra.mxu0 %v489
        %512 = vmatprep.subr.bf16.mxu0 0
        %513 = vmatpush1.bf16.msra.mxu0 %v488
        %514 = vmatprep.subr.bf16.mxu0 0
        %515 = vmatpush1.bf16.msra.mxu0 %v487
        %516 = vmatprep.subr.bf16.mxu0 0
        %517 = vmatpush1.bf16.msra.mxu0 %v486
        %518 = vmatprep.subr.bf16.mxu0 0
        %519 = vmatpush2.bf16.msra.mxu0 0
        %520 = vmatprep.subr.bf16.mxu0 0
        %521 = vmatpush2.bf16.msra.mxu0 0
        %522 = vmatprep.subr.bf16.mxu0 0
        %523 = vmatpush2.bf16.msra.mxu0 0
        %524 = vmatprep.subr.bf16.mxu0 0
        %525 = vmatpush2.bf16.msra.mxu0 0
        %526 = vmatprep.subr.bf16.mxu0 0
        %527 = vmatpush2.bf16.msra.mxu0 0
        %528 = vmatprep.subr.bf16.mxu0 0
        %529 = vmatpush2.bf16.msra.mxu0 0
        %530 = vmatprep.subr.bf16.mxu0 0
        %531 = vmatpush2.bf16.msra.mxu0 0
        %532 = vmatprep.subr.bf16.mxu0 0
        %533 = vmatpush2.bf16.msra.mxu0 0
        %534 = vmatprep.mubr.bf16.mxu0 0
        %535 = vmatmul.mubr.bf16.gmra.mxu0 %v422
        %v536 = vpop.f32.mrf.mxu0
        %v537 = vadd.f32 0.0, %v536
        %v538 = vpop.f32.mrf.mxu0
        %v539 = vpop.f32.mrf.mxu0
        %v540 = vadd.f32 0.0, %v539
        %v541 = vpop.f32.mrf.mxu0
        %542 = vmatprep.mubr.bf16.mxu0 0
        %543 = vmatmul.mubr.bf16.gmra.mxu0 %v423
        %v544 = vpop.f32.mrf.mxu0
        %v545 = vadd.f32 0.0, %v544
        %v546 = vpop.f32.mrf.mxu0
        %v547 = vpop.f32.mrf.mxu0
        %v548 = vadd.f32 0.0, %v547
        %v549 = vpop.f32.mrf.mxu0
        %550 = vmatprep.mubr.bf16.mxu0 0
        %551 = vmatmul.mubr.bf16.gmra.mxu0 %v424
        %v552 = vpop.f32.mrf.mxu0
        %v553 = vadd.f32 0.0, %v552
        %v554 = vpop.f32.mrf.mxu0
        %v555 = vpop.f32.mrf.mxu0
        %v556 = vadd.f32 0.0, %v555
        %v557 = vpop.f32.mrf.mxu0
        %558 = vmatprep.mubr.bf16.mxu0 0
        %559 = vmatmul.mubr.bf16.gmra.mxu0 %v425
        %v560 = vpop.f32.mrf.mxu0
        %v561 = vadd.f32 0.0, %v560
        %v562 = vpop.f32.mrf.mxu0
        %v563 = vpop.f32.mrf.mxu0
        %v564 = vadd.f32 0.0, %v563
        %v565 = vpop.f32.mrf.mxu0
        %566 = vmatprep.mubr.bf16.mxu0 0
        %567 = vmatmul.mubr.bf16.gmra.mxu0 %v426
        %v568 = vpop.f32.mrf.mxu0
        %v569 = vadd.f32 0.0, %v568
        %v570 = vpop.f32.mrf.mxu0
        %v571 = vpop.f32.mrf.mxu0
        %v572 = vadd.f32 0.0, %v571
        %v573 = vpop.f32.mrf.mxu0
        %574 = vmatprep.mubr.bf16.mxu0 0
        %575 = vmatmul.mubr.bf16.gmra.mxu0 %v427
        %v576 = vpop.f32.mrf.mxu0
        %v577 = vadd.f32 0.0, %v576
        %v578 = vpop.f32.mrf.mxu0
        %v579 = vpop.f32.mrf.mxu0
        %v580 = vadd.f32 0.0, %v579
        %v581 = vpop.f32.mrf.mxu0
        %582 = vmatprep.mubr.bf16.mxu0 0
        %583 = vmatmul.mubr.bf16.gmra.mxu0 %v428
        %v584 = vpop.f32.mrf.mxu0
        %v585 = vadd.f32 0.0, %v584
        %v586 = vpop.f32.mrf.mxu0
        %v587 = vpop.f32.mrf.mxu0
        %v588 = vadd.f32 0.0, %v587
        %v589 = vpop.f32.mrf.mxu0
        %590 = vmatprep.mubr.bf16.mxu0 0
        %591 = vmatmul.mubr.bf16.gmra.mxu0 %v429
        %v592 = vpop.f32.mrf.mxu0
        %v593 = vadd.f32 0.0, %v592
        %v594 = vpop.f32.mrf.mxu0
        %v595 = vpop.f32.mrf.mxu0
        %v596 = vadd.f32 0.0, %v595
        %v597 = vpop.f32.mrf.mxu0
        %598 = vmatprep.mubr.bf16.mxu0 0
        %599 = vmatmul.mubr.bf16.gmra.mxu0 %v430
        %v600 = vpop.f32.mrf.mxu0
        %v601 = vadd.f32 0.0, %v600
        %v602 = vpop.f32.mrf.mxu0
        %v603 = vpop.f32.mrf.mxu0
        %v604 = vadd.f32 0.0, %v603
        %v605 = vpop.f32.mrf.mxu0
        %606 = vmatprep.mubr.bf16.mxu0 0
        %607 = vmatmul.mubr.bf16.gmra.mxu0 %v431
        %v608 = vpop.f32.mrf.mxu0
        %v609 = vadd.f32 0.0, %v608
        %v610 = vpop.f32.mrf.mxu0
        %v611 = vpop.f32.mrf.mxu0
        %v612 = vadd.f32 0.0, %v611
        %v613 = vpop.f32.mrf.mxu0
        %614 = vmatprep.mubr.bf16.mxu0 0
        %615 = vmatmul.mubr.bf16.gmra.mxu0 %v432
        %v616 = vpop.f32.mrf.mxu0
        %v617 = vadd.f32 0.0, %v616
        %v618 = vpop.f32.mrf.mxu0
        %v619 = vpop.f32.mrf.mxu0
        %v620 = vadd.f32 0.0, %v619
        %v621 = vpop.f32.mrf.mxu0
        %622 = vmatprep.mubr.bf16.mxu0 0
        %623 = vmatmul.mubr.bf16.gmra.mxu0 %v433
        %v624 = vpop.f32.mrf.mxu0
        %v625 = vadd.f32 0.0, %v624
        %v626 = vpop.f32.mrf.mxu0
        %v627 = vpop.f32.mrf.mxu0
        %v628 = vadd.f32 0.0, %v627
        %v629 = vpop.f32.mrf.mxu0
        %630 = vmatprep.mubr.bf16.mxu0 0
        %631 = vmatmul.mubr.bf16.gmra.mxu0 %v434
        %v632 = vpop.f32.mrf.mxu0
        %v633 = vadd.f32 0.0, %v632
        %v634 = vpop.f32.mrf.mxu0
        %v635 = vpop.f32.mrf.mxu0
        %v636 = vadd.f32 0.0, %v635
        %v637 = vpop.f32.mrf.mxu0
        %638 = vmatprep.mubr.bf16.mxu0 0
        %639 = vmatmul.mubr.bf16.gmra.mxu0 %v435
        %v640 = vpop.f32.mrf.mxu0
        %v641 = vadd.f32 0.0, %v640
        %v642 = vpop.f32.mrf.mxu0
        %v643 = vpop.f32.mrf.mxu0
        %v644 = vadd.f32 0.0, %v643
        %v645 = vpop.f32.mrf.mxu0
        %646 = vmatprep.mubr.bf16.mxu0 0
        %647 = vmatmul.mubr.bf16.gmra.mxu0 %v436
        %v648 = vpop.f32.mrf.mxu0
        %v649 = vadd.f32 0.0, %v648
        %v650 = vpop.f32.mrf.mxu0
        %v651 = vpop.f32.mrf.mxu0
        %v652 = vadd.f32 0.0, %v651
        %v653 = vpop.f32.mrf.mxu0
        %654 = vmatprep.mubr.bf16.mxu0 0
        %655 = vmatmul.mubr.bf16.gmra.mxu0 %v437
        %v656 = vpop.f32.mrf.mxu0
        %v657 = vadd.f32 0.0, %v656
        %v658 = vpop.f32.mrf.mxu0
        %v659 = vpop.f32.mrf.mxu0
        %v660 = vadd.f32 0.0, %v659
        %v661 = vpop.f32.mrf.mxu0
        %662 = vdwg.mxu0
        %v663 = vadd.f32 %v278, %v537
        %v664 = vadd.f32 %v279, %v540
        %v665 = vadd.f32 %v280, %v545
        %v666 = vadd.f32 %v281, %v548
        %v667 = vadd.f32 %v282, %v553
        %v668 = vadd.f32 %v283, %v556
        %v669 = vadd.f32 %v284, %v561
        %v670 = vadd.f32 %v285, %v564
        %v671 = vadd.f32 %v286, %v569
        %v672 = vadd.f32 %v287, %v572
        %v673 = vadd.f32 %v288, %v577
        %v674 = vadd.f32 %v289, %v580
        %v675 = vadd.f32 %v290, %v585
        %v676 = vadd.f32 %v291, %v588
        %v677 = vadd.f32 %v292, %v593
        %v678 = vadd.f32 %v293, %v596
        %v679 = vadd.f32 %v294, %v601
        %v680 = vadd.f32 %v295, %v604
        %v681 = vadd.f32 %v296, %v609
        %v682 = vadd.f32 %v297, %v612
        %v683 = vadd.f32 %v298, %v617
        %v684 = vadd.f32 %v299, %v620
        %v685 = vadd.f32 %v300, %v625
        %v686 = vadd.f32 %v301, %v628
        %v687 = vadd.f32 %v302, %v633
        %v688 = vadd.f32 %v303, %v636
        %v689 = vadd.f32 %v304, %v641
        %v690 = vadd.f32 %v305, %v644
        %v691 = vadd.f32 %v306, %v649
        %v692 = vadd.f32 %v307, %v652
        %v693 = vadd.f32 %v308, %v657
        %v694 = vadd.f32 %v309, %v660
        %695 = vst [vmem:[#allocation2] sm:$0xff] %v663
        %696 = vst [vmem:[#allocation2 + $0x8] sm:$0xff] %v664
        %697 = vst [vmem:[#allocation2 + $0x10] sm:$0xff] %v665
        %698 = vst [vmem:[#allocation2 + $0x18] sm:$0xff] %v666
        %699 = vst [vmem:[#allocation2 + $0x20] sm:$0xff] %v667
        %700 = vst [vmem:[#allocation2 + $0x28] sm:$0xff] %v668
        %701 = vst [vmem:[#allocation2 + $0x30] sm:$0xff] %v669
        %702 = vst [vmem:[#allocation2 + $0x38] sm:$0xff] %v670
        %703 = vst [vmem:[#allocation2 + $0x40] sm:$0xff] %v671
        %704 = vst [vmem:[#allocation2 + $0x48] sm:$0xff] %v672
        %705 = vst [vmem:[#allocation2 + $0x50] sm:$0xff] %v673
        %706 = vst [vmem:[#allocation2 + $0x58] sm:$0xff] %v674
        %707 = vst [vmem:[#allocation2 + $0x60] sm:$0xff] %v675
        %708 = vst [vmem:[#allocation2 + $0x68] sm:$0xff] %v676
        %709 = vst [vmem:[#allocation2 + $0x70] sm:$0xff] %v677
        %710 = vst [vmem:[#allocation2 + $0x78] sm:$0xff] %v678
        %711 = vst [vmem:[#allocation2 + $0x80] sm:$0xff] %v679
        %712 = vst [vmem:[#allocation2 + $0x88] sm:$0xff] %v680
        %713 = vst [vmem:[#allocation2 + $0x90] sm:$0xff] %v681
        %714 = vst [vmem:[#allocation2 + $0x98] sm:$0xff] %v682
        %715 = vst [vmem:[#allocation2 + $0xa0] sm:$0xff] %v683
        %716 = vst [vmem:[#allocation2 + $0xa8] sm:$0xff] %v684
        %717 = vst [vmem:[#allocation2 + $0xb0] sm:$0xff] %v685
        %718 = vst [vmem:[#allocation2 + $0xb8] sm:$0xff] %v686
        %719 = vst [vmem:[#allocation2 + $0xc0] sm:$0xff] %v687
        %720 = vst [vmem:[#allocation2 + $0xc8] sm:$0xff] %v688
        %721 = vst [vmem:[#allocation2 + $0xd0] sm:$0xff] %v689
        %722 = vst [vmem:[#allocation2 + $0xd8] sm:$0xff] %v690
        %723 = vst [vmem:[#allocation2 + $0xe0] sm:$0xff] %v691
        %724 = vst [vmem:[#allocation2 + $0xe8] sm:$0xff] %v692
        %725 = vst [vmem:[#allocation2 + $0xf0] sm:$0xff] %v693
        %726 = vst [vmem:[#allocation2 + $0xf8] sm:$0xff] %v694
        // Predicated region
        $region41: #{tpu_custom_call.1} parent=27 // pred_check
          %p727 = pneg %p242
        $region42: #{tpu_custom_call.1} parent=27 // pred_check_branch
          %729 = sbr.rel (%p727) target = $region44
        $region43: #{tpu_custom_call.1} parent=27 // pred_region
          %v730 = vld [vmem:[#allocation2] sm:$0xff]
          %v731 = vld [vmem:[#allocation2 + $0x8] sm:$0xff]
          %v732 = vld [vmem:[#allocation2 + $0x10] sm:$0xff]
          %v733 = vld [vmem:[#allocation2 + $0x18] sm:$0xff]
          %v734 = vld [vmem:[#allocation2 + $0x20] sm:$0xff]
          %v735 = vld [vmem:[#allocation2 + $0x28] sm:$0xff]
          %v736 = vld [vmem:[#allocation2 + $0x30] sm:$0xff]
          %v737 = vld [vmem:[#allocation2 + $0x38] sm:$0xff]
          %v738 = vld [vmem:[#allocation2 + $0x40] sm:$0xff]
          %v739 = vld [vmem:[#allocation2 + $0x48] sm:$0xff]
          %v740 = vld [vmem:[#allocation2 + $0x50] sm:$0xff]
          %v741 = vld [vmem:[#allocation2 + $0x58] sm:$0xff]
          %v742 = vld [vmem:[#allocation2 + $0x60] sm:$0xff]
          %v743 = vld [vmem:[#allocation2 + $0x68] sm:$0xff]
          %v744 = vld [vmem:[#allocation2 + $0x70] sm:$0xff]
          %v745 = vld [vmem:[#allocation2 + $0x78] sm:$0xff]
          %v746 = vld [vmem:[#allocation2 + $0x80] sm:$0xff]
          %v747 = vld [vmem:[#allocation2 + $0x88] sm:$0xff]
          %v748 = vld [vmem:[#allocation2 + $0x90] sm:$0xff]
          %v749 = vld [vmem:[#allocation2 + $0x98] sm:$0xff]
          %v750 = vld [vmem:[#allocation2 + $0xa0] sm:$0xff]
          %v751 = vld [vmem:[#allocation2 + $0xa8] sm:$0xff]
          %v752 = vld [vmem:[#allocation2 + $0xb0] sm:$0xff]
          %v753 = vld [vmem:[#allocation2 + $0xb8] sm:$0xff]
          %v754 = vld [vmem:[#allocation2 + $0xc0] sm:$0xff]
          %v755 = vld [vmem:[#allocation2 + $0xc8] sm:$0xff]
          %v756 = vld [vmem:[#allocation2 + $0xd0] sm:$0xff]
          %v757 = vld [vmem:[#allocation2 + $0xd8] sm:$0xff]
          %v758 = vld [vmem:[#allocation2 + $0xe0] sm:$0xff]
          %v759 = vld [vmem:[#allocation2 + $0xe8] sm:$0xff]
          %v760 = vld [vmem:[#allocation2 + $0xf0] sm:$0xff]
          %v761 = vld [vmem:[#allocation2 + $0xf8] sm:$0xff]
          %762 = vst [vmem:[%s230] sm:$0xff] %v730
          %763 = vst [vmem:[%s230 + $0x8] sm:$0xff] %v731
          %764 = vst [vmem:[%s230 + $0x10] sm:$0xff] %v732
          %765 = vst [vmem:[%s230 + $0x18] sm:$0xff] %v733
          %766 = vst [vmem:[%s230 + $0x20] sm:$0xff] %v734
          %767 = vst [vmem:[%s230 + $0x28] sm:$0xff] %v735
          %768 = vst [vmem:[%s230 + $0x30] sm:$0xff] %v736
          %769 = vst [vmem:[%s230 + $0x38] sm:$0xff] %v737
          %770 = vst [vmem:[%s230 + $0x40] sm:$0xff] %v738
          %771 = vst [vmem:[%s230 + $0x48] sm:$0xff] %v739
          %772 = vst [vmem:[%s230 + $0x50] sm:$0xff] %v740
          %773 = vst [vmem:[%s230 + $0x58] sm:$0xff] %v741
          %774 = vst [vmem:[%s230 + $0x60] sm:$0xff] %v742
          %775 = vst [vmem:[%s230 + $0x68] sm:$0xff] %v743
          %776 = vst [vmem:[%s230 + $0x70] sm:$0xff] %v744
          %777 = vst [vmem:[%s230 + $0x78] sm:$0xff] %v745
          %778 = vst [vmem:[%s230 + $0x80] sm:$0xff] %v746
          %779 = vst [vmem:[%s230 + $0x88] sm:$0xff] %v747
          %780 = vst [vmem:[%s230 + $0x90] sm:$0xff] %v748
          %781 = vst [vmem:[%s230 + $0x98] sm:$0xff] %v749
          %782 = vst [vmem:[%s230 + $0xa0] sm:$0xff] %v750
          %783 = vst [vmem:[%s230 + $0xa8] sm:$0xff] %v751
          %784 = vst [vmem:[%s230 + $0xb0] sm:$0xff] %v752
          %785 = vst [vmem:[%s230 + $0xb8] sm:$0xff] %v753
          %786 = vst [vmem:[%s230 + $0xc0] sm:$0xff] %v754
          %787 = vst [vmem:[%s230 + $0xc8] sm:$0xff] %v755
          %788 = vst [vmem:[%s230 + $0xd0] sm:$0xff] %v756
          %789 = vst [vmem:[%s230 + $0xd8] sm:$0xff] %v757
          %790 = vst [vmem:[%s230 + $0xe0] sm:$0xff] %v758
          %791 = vst [vmem:[%s230 + $0xe8] sm:$0xff] %v759
          %792 = vst [vmem:[%s230 + $0xf0] sm:$0xff] %v760
          %793 = vst [vmem:[%s230 + $0xf8] sm:$0xff] %v761
          %v794 = vadd.f32 %v730, %v731
          %v795 = vadd.f32 %v794, %v732
          %v796 = vadd.f32 %v795, %v733
          %v797 = vadd.f32 %v796, %v734
          %v798 = vadd.f32 %v797, %v735
          %v799 = vadd.f32 %v798, %v736
          %v800 = vadd.f32 %v799, %v737
          %v801 = vadd.f32 %v800, %v738
          %v802 = vadd.f32 %v801, %v739
          %v803 = vadd.f32 %v802, %v740
          %v804 = vadd.f32 %v803, %v741
          %v805 = vadd.f32 %v804, %v742
          %v806 = vadd.f32 %v805, %v743
          %v807 = vadd.f32 %v806, %v744
          %v808 = vadd.f32 %v807, %v745
          %v809 = vadd.f32 %v808, %v746
          %v810 = vadd.f32 %v809, %v747
          %v811 = vadd.f32 %v810, %v748
          %v812 = vadd.f32 %v811, %v749
          %v813 = vadd.f32 %v812, %v750
          %v814 = vadd.f32 %v813, %v751
          %v815 = vadd.f32 %v814, %v752
          %v816 = vadd.f32 %v815, %v753
          %v817 = vadd.f32 %v816, %v754
          %v818 = vadd.f32 %v817, %v755
          %v819 = vadd.f32 %v818, %v756
          %v820 = vadd.f32 %v819, %v757
          %v821 = vadd.f32 %v820, %v758
          %v822 = vadd.f32 %v821, %v759
          %v823 = vadd.f32 %v822, %v760
          %v824 = vadd.f32 %v823, %v761
          %v825 = vrot.slane %v824, 4
          %v826 = vadd.f32 %v824, %v825
          %v827 = vrot.slane %v826, 2
          %v828 = vadd.f32 %v826, %v827
          %v829 = vrot.slane %v828, 1
          %v830 = vadd.f32 %v828, %v829
          %v831 = vmul.f32 %v730, %v730
          %v832 = vmul.f32 %v731, %v731
          %v833 = vmul.f32 %v732, %v732
          %v834 = vmul.f32 %v733, %v733
          %v835 = vmul.f32 %v734, %v734
          %v836 = vmul.f32 %v735, %v735
          %v837 = vmul.f32 %v736, %v736
          %v838 = vmul.f32 %v737, %v737
          %v839 = vmul.f32 %v738, %v738
          %v840 = vmul.f32 %v739, %v739
          %v841 = vmul.f32 %v740, %v740
          %v842 = vmul.f32 %v741, %v741
          %v843 = vmul.f32 %v742, %v742
          %v844 = vmul.f32 %v743, %v743
          %v845 = vmul.f32 %v744, %v744
          %v846 = vmul.f32 %v745, %v745
          %v847 = vmul.f32 %v746, %v746
          %v848 = vmul.f32 %v747, %v747
          %v849 = vmul.f32 %v748, %v748
          %v850 = vmul.f32 %v749, %v749
          %v851 = vmul.f32 %v750, %v750
          %v852 = vmul.f32 %v751, %v751
          %v853 = vmul.f32 %v752, %v752
          %v854 = vmul.f32 %v753, %v753
          %v855 = vmul.f32 %v754, %v754
          %v856 = vmul.f32 %v755, %v755
          %v857 = vmul.f32 %v756, %v756
          %v858 = vmul.f32 %v757, %v757
          %v859 = vmul.f32 %v758, %v758
          %v860 = vmul.f32 %v759, %v759
          %v861 = vmul.f32 %v760, %v760
          %v862 = vmul.f32 %v761, %v761
          %v863 = vadd.f32 %v831, %v832
          %v864 = vadd.f32 %v863, %v833
          %v865 = vadd.f32 %v864, %v834
          %v866 = vadd.f32 %v865, %v835
          %v867 = vadd.f32 %v866, %v836
          %v868 = vadd.f32 %v867, %v837
          %v869 = vadd.f32 %v868, %v838
          %v870 = vadd.f32 %v869, %v839
          %v871 = vadd.f32 %v870, %v840
          %v872 = vadd.f32 %v871, %v841
          %v873 = vadd.f32 %v872, %v842
          %v874 = vadd.f32 %v873, %v843
          %v875 = vadd.f32 %v874, %v844
          %v876 = vadd.f32 %v875, %v845
          %v877 = vadd.f32 %v876, %v846
          %v878 = vadd.f32 %v877, %v847
          %v879 = vadd.f32 %v878, %v848
          %v880 = vadd.f32 %v879, %v849
          %v881 = vadd.f32 %v880, %v850
          %v882 = vadd.f32 %v881, %v851
          %v883 = vadd.f32 %v882, %v852
          %v884 = vadd.f32 %v883, %v853
          %v885 = vadd.f32 %v884, %v854
          %v886 = vadd.f32 %v885, %v855
          %v887 = vadd.f32 %v886, %v856
          %v888 = vadd.f32 %v887, %v857
          %v889 = vadd.f32 %v888, %v858
          %v890 = vadd.f32 %v889, %v859
          %v891 = vadd.f32 %v890, %v860
          %v892 = vadd.f32 %v891, %v861
          %v893 = vadd.f32 %v892, %v862
          %v894 = vrot.slane %v893, 4
          %v895 = vadd.f32 %v893, %v894
          %v896 = vrot.slane %v895, 2
          %v897 = vadd.f32 %v895, %v896
          %v898 = vrot.slane %v897, 1
          %v899 = vadd.f32 %v897, %v898
          %v900 = vlaneseq
          %v901 = vshrl.u32 %v900, 7
          %vm902 = vcmp.lt.s32.totalorder %v901, 4
          %v903 = vsel %vm902, %v830, %v899
          %904 = vst [vmem:[%s237] sm:$0xff] %v903
        $region44: #{tpu_custom_call.1} parent=27 // pred_fallthru
          _
        %s905 = sand.u32 %s99, 1
        %s906 = scalar_lea.sflag [#allocation5], %s905
        %s907 = sand.u32 %s99, 1
        %s908 = smul.addr %s907, 256
        %s909 = scalar_lea.vmem [#allocation8], %s908
        %s910 = sand.u32 %s125, 1
        %s911 = scalar_lea.sflag [#allocation10], %s910
        %s912 = sand.u32 %s125, 1
        %s913 = smul.addr %s912, 8
        %s914 = scalar_lea.vmem [#allocation9], %s913
        // Predicated region
        $region45: #{tpu_custom_call.1} parent=27 // pred_check
          %p915 = pneg %p109
        $region46: #{tpu_custom_call.1} parent=27 // pred_check_branch
          %917 = sbr.rel (%p915) target = $region48
        $region47: #{tpu_custom_call.1} parent=27 // pred_region
          %s918 = smul.u32 32, %s29
          %s920 = ssub.s32 4096, 4096
          %921 = vsyncadd %s906, %s920
          %s922 = smul.addr %s918, 128
          %s923 = scalar_lea.hbm %s2, %s922
          %s924 = sshll.u32 %s909, 4
          %s925 = int_to_ptr.vmem [resolvable:$true] %s924
          %930 = dma.vmem_to_hbm [thread:$0]  %s925, 4096, %s923, %s906, 128, 128, 8
        $region48: #{tpu_custom_call.1} parent=27 // pred_fallthru
          _
        // Predicated region
        $region49: #{tpu_custom_call.1} parent=27 // pred_check
          %p931 = pneg %p135
        $region50: #{tpu_custom_call.1} parent=27 // pred_check_branch
          %933 = sbr.rel (%p931) target = $region52
        $region51: #{tpu_custom_call.1} parent=27 // pred_region
          %s935 = ssub.s32 128, 128
          %936 = vsyncadd %s911, %s935
          %s937 = smul.addr %s29, 128
          %s938 = scalar_lea.hbm %s3, %s937
          %s940 = sshll.u32 %s914, 4
          %s941 = int_to_ptr.vmem [resolvable:$true] %s940
          %943 = dma.vmem_to_hbm [thread:$0]  %s941, 128, %s938, %s911
        $region52: #{tpu_custom_call.1} parent=27 // pred_fallthru
          _
      $region28: #{tpu_custom_call.1} parent=5 // pred_fallthru
        _
      %p944 = scmp.le.s32.totalorder 2, %s20
      // Predicated region
      $region53: #{tpu_custom_call.1} parent=5 // pred_check
        %p945 = pneg %p944
      $region54: #{tpu_custom_call.1} parent=5 // pred_check_branch
        %947 = sbr.rel (%p945) target = $region56
      $region55: #{tpu_custom_call.1} parent=5 // pred_region
        %s948 = ssub.s32 %s20, 2
        // Predicated region
        $region57: #{tpu_custom_call.1} parent=55 // pred_check
          %p949 = pneg %p115
        $region58: #{tpu_custom_call.1} parent=55 // pred_check_branch
          %951 = sbr.rel (%p949) target = $region60
        $region59: #{tpu_custom_call.1} parent=55 // pred_region
          %s952 = sand.u32 %s100, 1
          %s953 = scalar_lea.sflag [#allocation5], %s952
          %s954 = sand.u32 %s100, 1
          %s955 = smul.addr %s954, 256
          %s956 = scalar_lea.vmem [#allocation8], %s955
          %957 = dma.done %s953, 4096
        $region60: #{tpu_custom_call.1} parent=55 // pred_fallthru
          _
        // Predicated region
        $region61: #{tpu_custom_call.1} parent=55 // pred_check
          %p958 = pneg %p141
        $region62: #{tpu_custom_call.1} parent=55 // pred_check_branch
          %960 = sbr.rel (%p958) target = $region64
        $region63: #{tpu_custom_call.1} parent=55 // pred_region
          %s961 = sand.u32 %s126, 1
          %s962 = scalar_lea.sflag [#allocation10], %s961
          %s963 = sand.u32 %s126, 1
          %s964 = smul.addr %s963, 8
          %s965 = scalar_lea.vmem [#allocation9], %s964
          %966 = dma.done %s962, 128
        $region64: #{tpu_custom_call.1} parent=55 // pred_fallthru
          _
      $region56: #{tpu_custom_call.1} parent=5 // pred_fallthru
        _
    $region6: #{tpu_custom_call.1} parent=1 // loop_footer
      %s24 = sadd.s32 1, %s20
    $region7: #{tpu_custom_call.1} parent=1 // loop_footer_branch
      %19 = sbr.rel target = $region3
    $region8: #{tpu_custom_call.1} parent=1 // loop_exit
      _
    %967 = vsyncpa [#allocation4], 1
    %s968 = scalar_lea.sflag [#allocation4], 1
    %969 = vsyncpa %s968, 1
    %970 = vsyncpa [#allocation7], 1
    %971 = vsyncpa [#allocation5], 1
    %s972 = scalar_lea.sflag [#allocation5], 1
    %973 = vsyncpa %s972, 1
    %974 = vsyncpa [#allocation10], 1
    %s975 = scalar_lea.sflag [#allocation10], 1
    %976 = vsyncpa %s975, 1

</llo_original>
